<compile_context>
chip_gen: v7x
topology: tpu7x:2x2x1
jax: 0.10.0
libtpu: 0.0.40
codegen_flags: <defaults>
</compile_context>

<pallas_src>
import functools

import jax
import jax.numpy as jnp
from jax.experimental import pallas as pl
from jax.experimental.pallas import tpu as pltpu


MATMUL_DTYPE = jnp.bfloat16   # MXU operand dtype (f32 accumulation)


def _round_up(n, m):
    return ((n + m - 1) // m) * m


def _silu(h):
    # SiLU via tanh: sigmoid(h) = 0.5*(tanh(0.5*h)+1) -> single EUP push/vreg.
    return 0.5 * h * (jnp.tanh(0.5 * h) + 1.0)


def actor_kernel(x_ref, w1_ref, b1_ref, w2_ref, b2_ref, wh_ref, bh_ref,
                 out_ref, *, ew_dtype):
    # x_ref: [3, TB] (matmul dtype). Weights are [out, in]; biases [out, 1] f32.

    # ---- fc[0]: Linear(3 -> 128) + SiLU      -> h: [128, TB] ----
    h = jnp.dot(w1_ref[...], x_ref[...],
                preferred_element_type=jnp.float32) + b1_ref[...]
    h = _silu(h.astype(ew_dtype))

    # ---- fc[2]: Linear(128 -> 128) + SiLU ----
    h = jnp.dot(w2_ref[...], h.astype(w2_ref.dtype),
                preferred_element_type=jnp.float32) + b2_ref[...]
    h = _silu(h.astype(ew_dtype))

    # ---- fused heads: Linear(128 -> 2)       -> heads: [2, TB] ----
    heads = jnp.dot(wh_ref[...], h.astype(wh_ref.dtype),
                    preferred_element_type=jnp.float32) + bh_ref[...]

    # Row 0 = mu (identity); row 1 = sigma = exp(clip(., -20, 2)).
    out_ref[0:1, :] = heads[0:1, :].astype(out_ref.dtype)
    out_ref[1:2, :] = jnp.exp(
        jnp.clip(heads[1:2, :], -20.0, 2.0)).astype(out_ref.dtype)


def default_elementwise_dtype():
    """bf16 elementwise on chips with a bf16 VPU/EUP (v6e/v7x), else f32."""
    try:
        kind = jax.devices()[0].device_kind.lower()
    except Exception:
        return jnp.float32
    if any(tag in kind for tag in ("v6", "v7", "7x")):
        return jnp.bfloat16
    return jnp.float32


def prepare_params(params, *, matmul_dtype=MATMUL_DTYPE, elementwise_dtype=None):
    """One-time weight prep: [out, in] layout, fused heads, bf16 casts.
    Hoisted out of the per-step call path."""
    if elementwise_dtype is None:
        elementwise_dtype = default_elementwise_dtype()
    wh = jnp.concatenate([params["wh1"], params["wh2"]], axis=1)   # [128, 2]
    bh = jnp.concatenate([params["bh1"], params["bh2"]], axis=1)   # [1, 2]
    return {
        "w1": params["w1"].T.astype(matmul_dtype),    # [128, 3]
        "b1": params["b1"].reshape(-1, 1),            # [128, 1] f32
        "w2": params["w2"].T.astype(matmul_dtype),    # [128, 128]
        "b2": params["b2"].reshape(-1, 1),            # [128, 1] f32
        "wh": wh.T.astype(matmul_dtype),              # [2, 128]  (row0=mu, row1=sigma)
        "bh": bh.reshape(-1, 1),                      # [2, 1]    f32
        "matmul_dtype": matmul_dtype,
        "elementwise_dtype": elementwise_dtype,
    }


def _choose_tile(batch, block_b):
    b128 = _round_up(max(batch, 1), 128)              # lane axis: multiple of 128
    tb = min(_round_up(block_b, 128), b128)
    if b128 >= 256:
        # Guarantee >=2 grid steps so ("parallel",) can split the batch axis
        # across v7x's two TensorCores (harmless ~0.35us extra on v5e/v6e).
        tb = min(tb, _round_up(pl.cdiv(b128, 2), 128))
    b_pad = _round_up(b128, tb)
    return tb, b_pad


def actor_forward(x, prepped, *, block_b=2048):
    """x: [B, 3] float32 -> (mu: [B, 1], sigma: [B, 1])."""
    B = x.shape[0]
    tb, b_pad = _choose_tile(B, block_b)

    # Layout plumbing (wrapper-side): batch on the lane axis, MXU operand dtype.
    x_t = jnp.transpose(x).astype(prepped["matmul_dtype"])        # [3, B]
    if b_pad != B:
        x_t = jnp.pad(x_t, ((0, 0), (0, b_pad - B)))

    w1, b1 = prepped["w1"], prepped["b1"]
    w2, b2 = prepped["w2"], prepped["b2"]
    wh, bh = prepped["wh"], prepped["bh"]
    const = lambda i: (0, 0)    # weights stay resident across the batch grid

    kernel = functools.partial(actor_kernel,
                               ew_dtype=prepped["elementwise_dtype"])
    out = pl.pallas_call(
        kernel,
        out_shape=jax.ShapeDtypeStruct((2, b_pad), jnp.float32),
        grid=(b_pad // tb,),
        in_specs=[
            pl.BlockSpec((3, tb), lambda i: (0, i)),      # x tile (lane-dense DMA)
            pl.BlockSpec(w1.shape, const), pl.BlockSpec(b1.shape, const),
            pl.BlockSpec(w2.shape, const), pl.BlockSpec(b2.shape, const),
            pl.BlockSpec(wh.shape, const), pl.BlockSpec(bh.shape, const),
        ],
        out_specs=pl.BlockSpec((2, tb), lambda i: (0, i)),  # rows: [mu; sigma]
        compiler_params=pltpu.CompilerParams(
            dimension_semantics=("parallel",)),
    )(x_t, w1, b1, w2, b2, wh, bh)

    mu = out[0, :B][:, None]
    sigma = out[1, :B][:, None]
    return mu, sigma


def init_params(key):
    """Deterministic init mirroring torch.nn.Linear defaults
    (uniform(-1/sqrt(fan_in), 1/sqrt(fan_in))). Weights stored as [in, out]."""
    def linear(k, fan_in, fan_out):
        kw, kb = jax.random.split(k)
        bound = 1.0 / jnp.sqrt(jnp.float32(fan_in))
        w = jax.random.uniform(kw, (fan_in, fan_out), jnp.float32, -bound, bound)
        b = jax.random.uniform(kb, (1, fan_out), jnp.float32, -bound, bound)
        return w, b

    k1, k2, k3, k4 = jax.random.split(key, 4)
    w1, b1 = linear(k1, 3, 128)
    w2, b2 = linear(k2, 128, 128)
    wh1, bh1 = linear(k3, 128, 1)
    wh2, bh2 = linear(k4, 128, 1)
    return {"w1": w1, "b1": b1, "w2": w2, "b2": b2,
            "wh1": wh1, "bh1": bh1, "wh2": wh2, "bh2": bh2}


def actor_ref_policy(x, p, ew_dtype, mm_dtype):
    """Pure-JAX reference mirroring the kernel's dtype policy (tight check)."""
    h = jnp.dot(x.astype(mm_dtype), p["w1"].astype(mm_dtype),
                preferred_element_type=jnp.float32) + p["b1"]
    h = _silu(h.astype(ew_dtype))
    h = jnp.dot(h.astype(mm_dtype), p["w2"].astype(mm_dtype),
                preferred_element_type=jnp.float32) + p["b2"]
    h = _silu(h.astype(ew_dtype))
    hm = h.astype(mm_dtype)
    mu = jnp.dot(hm, p["wh1"].astype(mm_dtype),
                 preferred_element_type=jnp.float32) + p["bh1"]
    s = jnp.dot(hm, p["wh2"].astype(mm_dtype),
                preferred_element_type=jnp.float32) + p["bh2"]
    return mu, jnp.exp(jnp.clip(s, -20.0, 2.0))


def actor_ref_f32(x, p):
    """PyTorch-faithful f32 reference (loose semantic check)."""
    h = jax.nn.silu(x @ p["w1"] + p["b1"])
    h = jax.nn.silu(h @ p["w2"] + p["b2"])
    mu = h @ p["wh1"] + p["bh1"]
    s = h @ p["wh2"] + p["bh2"]
    return mu, jnp.exp(jnp.clip(s, -20.0, 2.0))


if __name__ == "__main__":
    key = jax.random.PRNGKey(0)
    k_params, k_x, k_x2 = jax.random.split(key, 3)

    params = init_params(k_params)
    prepped = prepare_params(params)          # one-time weight prep
    ew = prepped["elementwise_dtype"]
    mm = prepped["matmul_dtype"]

    # Tolerances: tight vs a dtype-policy-matched reference; loose vs pure f32
    # (bf16 MXU operands / optional bf16 elementwise drift from f32 math).
    if ew == jnp.bfloat16:
        tight = dict(atol=5e-2, rtol=4e-2)
    else:
        tight = dict(atol=5e-3, rtol=5e-3)
    loose = dict(atol=1e-1, rtol=8e-2)

    def check(mu, sigma, x):
        mu_p, sg_p = actor_ref_policy(x, params, ew, mm)
        mu_f, sg_f = actor_ref_f32(x, params)
        assert jnp.allclose(mu, mu_p, **tight), "mu mismatch (policy ref)"
        assert jnp.allclose(sigma, sg_p, **tight), "sigma mismatch (policy ref)"
        assert jnp.allclose(mu, mu_f, **loose), "mu mismatch (f32 ref)"
        assert jnp.allclose(sigma, sg_f, **loose), "sigma mismatch (f32 ref)"
        assert bool(jnp.all(sigma > 0.0))
        assert bool(jnp.all(sigma <= jnp.exp(2.0) * (1.0 + 1e-3)))

    # Tiny per-step batch (obs dim = 3): single tile, weights resident.
    B = 8
    x = jax.random.normal(k_x, (B, 3), jnp.float32)
    mu, sigma = actor_forward(x, prepped)
    jax.block_until_ready((mu, sigma))
    assert mu.shape == (B, 1) and sigma.shape == (B, 1)
    check(mu, sigma, x)

    # Larger ragged batch: multi-step grid (>=2 steps -> v7x 2-TC sharding),
    # last-tile padding, resident weights, lane-dense x / output tiles.
    B2 = 1000
    x2 = jax.random.normal(k_x2, (B2, 3), jnp.float32)
    mu2, sigma2 = actor_forward(x2, prepped)
    jax.block_until_ready((mu2, sigma2))
    assert mu2.shape == (B2, 1) and sigma2.shape == (B2, 1)
    check(mu2, sigma2, x2)

    # Smaller tile size: exercises a 4-step grid on the same inputs.
    mu3, sigma3 = actor_forward(x2, prepped, block_b=256)
    jax.block_until_ready((mu3, sigma3))
    check(mu3, sigma3, x2)

    print("KERNEL_OK")
</pallas_src>

<mosaic_0001>
module attributes {stable_mosaic.version = 11 : i64} {
  func.func @actor_kernel(%arg0: i32, %arg1: memref<3x128xbf16, #tpu.memory_space<vmem>>, %arg2: memref<128x3xbf16, #tpu.memory_space<vmem>>, %arg3: memref<128x1xf32, #tpu.memory_space<vmem>>, %arg4: memref<128x128xbf16, #tpu.memory_space<vmem>>, %arg5: memref<128x1xf32, #tpu.memory_space<vmem>>, %arg6: memref<2x128xbf16, #tpu.memory_space<vmem>>, %arg7: memref<2x1xf32, #tpu.memory_space<vmem>>, %arg8: memref<2x128xf32, #tpu.memory_space<vmem>>) attributes {dimension_semantics = [#tpu.dimension_semantics<parallel>], iteration_bounds = array<i64: 1>, scalar_prefetch = 0 : i64, scratch_operands = 0 : i64, tpu.core_type = #tpu.core_type<tc>, window_params = [{transform_indices = @transform_0, window_bounds = array<i64: 3, 128>}, {pipeline_mode = #tpu.pipeline_mode<synchronous>, transform_indices = @transform_1, window_bounds = array<i64: 128, 3>}, {pipeline_mode = #tpu.pipeline_mode<synchronous>, transform_indices = @transform_2, window_bounds = array<i64: 128, 1>}, {pipeline_mode = #tpu.pipeline_mode<synchronous>, transform_indices = @transform_3, window_bounds = array<i64: 128, 128>}, {pipeline_mode = #tpu.pipeline_mode<synchronous>, transform_indices = @transform_4, window_bounds = array<i64: 128, 1>}, {pipeline_mode = #tpu.pipeline_mode<synchronous>, transform_indices = @transform_5, window_bounds = array<i64: 2, 128>}, {pipeline_mode = #tpu.pipeline_mode<synchronous>, transform_indices = @transform_6, window_bounds = array<i64: 2, 1>}, {transform_indices = @transform_7, window_bounds = array<i64: 2, 128>}]} {
    %c0 = arith.constant 0 : index
    %c0_0 = arith.constant 0 : index
    %0 = vector.load %arg2[%c0, %c0_0] : memref<128x3xbf16, #tpu.memory_space<vmem>>, vector<128x3xbf16>
    %c0_1 = arith.constant 0 : index
    %c0_2 = arith.constant 0 : index
    %1 = vector.load %arg1[%c0_1, %c0_2] : memref<3x128xbf16, #tpu.memory_space<vmem>>, vector<3x128xbf16>
    %cst = arith.constant dense<0.000000e+00> : vector<128x128xf32>
    %2 = tpu.matmul %0, %1, %cst {dimension_numbers = #tpu.dot_dimension_numbers<[1], [0], [0], [1], [0, 0, 1, 1], [], []>} : vector<128x3xbf16>, vector<3x128xbf16>, vector<128x128xf32> -> vector<128x128xf32>
    %c0_3 = arith.constant 0 : index
    %c0_4 = arith.constant 0 : index
    %3 = vector.load %arg3[%c0_3, %c0_4] : memref<128x1xf32, #tpu.memory_space<vmem>>, vector<128x1xf32>
    %4 = vector.broadcast %3 : vector<128x1xf32> to vector<128x128xf32>
    %5 = arith.addf %2, %4 : vector<128x128xf32>
    %cst_5 = arith.constant 5.000000e-01 : f32
    %6 = vector.broadcast %cst_5 : f32 to vector<128x128xf32>
    %7 = arith.mulf %6, %5 : vector<128x128xf32>
    %cst_6 = arith.constant 5.000000e-01 : f32
    %8 = vector.broadcast %cst_6 : f32 to vector<128x128xf32>
    %9 = arith.mulf %8, %5 : vector<128x128xf32>
    %10 = math.tanh %9 : vector<128x128xf32>
    %cst_7 = arith.constant 1.000000e+00 : f32
    %11 = vector.broadcast %cst_7 : f32 to vector<128x128xf32>
    %12 = arith.addf %10, %11 : vector<128x128xf32>
    %13 = arith.mulf %7, %12 : vector<128x128xf32>
    %c0_8 = arith.constant 0 : index
    %c0_9 = arith.constant 0 : index
    %14 = vector.load %arg4[%c0_8, %c0_9] : memref<128x128xbf16, #tpu.memory_space<vmem>>, vector<128x128xbf16>
    %15 = arith.truncf %13 : vector<128x128xf32> to vector<128x128xbf16>
    %cst_10 = arith.constant dense<0.000000e+00> : vector<128x128xf32>
    %16 = tpu.matmul %14, %15, %cst_10 {dimension_numbers = #tpu.dot_dimension_numbers<[1], [0], [0], [1], [0, 0, 1, 1], [], []>} : vector<128x128xbf16>, vector<128x128xbf16>, vector<128x128xf32> -> vector<128x128xf32>
    %c0_11 = arith.constant 0 : index
    %c0_12 = arith.constant 0 : index
    %17 = vector.load %arg5[%c0_11, %c0_12] : memref<128x1xf32, #tpu.memory_space<vmem>>, vector<128x1xf32>
    %18 = vector.broadcast %17 : vector<128x1xf32> to vector<128x128xf32>
    %19 = arith.addf %16, %18 : vector<128x128xf32>
    %cst_13 = arith.constant 5.000000e-01 : f32
    %20 = vector.broadcast %cst_13 : f32 to vector<128x128xf32>
    %21 = arith.mulf %20, %19 : vector<128x128xf32>
    %cst_14 = arith.constant 5.000000e-01 : f32
    %22 = vector.broadcast %cst_14 : f32 to vector<128x128xf32>
    %23 = arith.mulf %22, %19 : vector<128x128xf32>
    %24 = math.tanh %23 : vector<128x128xf32>
    %cst_15 = arith.constant 1.000000e+00 : f32
    %25 = vector.broadcast %cst_15 : f32 to vector<128x128xf32>
    %26 = arith.addf %24, %25 : vector<128x128xf32>
    %27 = arith.mulf %21, %26 : vector<128x128xf32>
    %c0_16 = arith.constant 0 : index
    %c0_17 = arith.constant 0 : index
    %28 = vector.load %arg6[%c0_16, %c0_17] : memref<2x128xbf16, #tpu.memory_space<vmem>>, vector<2x128xbf16>
    %29 = arith.truncf %27 : vector<128x128xf32> to vector<128x128xbf16>
    %cst_18 = arith.constant dense<0.000000e+00> : vector<2x128xf32>
    %30 = tpu.matmul %28, %29, %cst_18 {dimension_numbers = #tpu.dot_dimension_numbers<[1], [0], [0], [1], [0, 0, 1, 1], [], []>} : vector<2x128xbf16>, vector<128x128xbf16>, vector<2x128xf32> -> vector<2x128xf32>
    %c0_19 = arith.constant 0 : index
    %c0_20 = arith.constant 0 : index
    %31 = vector.load %arg7[%c0_19, %c0_20] : memref<2x1xf32, #tpu.memory_space<vmem>>, vector<2x1xf32>
    %32 = vector.broadcast %31 : vector<2x1xf32> to vector<2x128xf32>
    %33 = arith.addf %30, %32 : vector<2x128xf32>
    %34 = vector.extract_strided_slice %33 {offsets = [0, 0], sizes = [1, 128], strides = [1, 1]} : vector<2x128xf32> to vector<1x128xf32>
    %c0_21 = arith.constant 0 : index
    %c0_22 = arith.constant 0 : index
    %35 = vector.load %arg8[%c0_21, %c0_22] : memref<2x128xf32, #tpu.memory_space<vmem>>, vector<1x128xf32>
    tpu.vector_store %arg8[%c0_21, %c0_22], %34 {strides = array<i32>} : memref<2x128xf32, #tpu.memory_space<vmem>>, vector<1x128xf32>,
    %36 = vector.extract_strided_slice %33 {offsets = [1, 0], sizes = [1, 128], strides = [1, 1]} : vector<2x128xf32> to vector<1x128xf32>
    %cst_23 = arith.constant -2.000000e+01 : f32
    %cst_24 = arith.constant 2.000000e+00 : f32
    %37 = vector.broadcast %cst_23 : f32 to vector<1x128xf32>
    %38 = arith.maximumf %37, %36 : vector<1x128xf32>
    %39 = vector.broadcast %cst_24 : f32 to vector<1x128xf32>
    %40 = arith.minimumf %39, %38 : vector<1x128xf32>
    %41 = math.exp %40 : vector<1x128xf32>
    %c1 = arith.constant 1 : index
    %c0_25 = arith.constant 0 : index
    %42 = vector.load %arg8[%c1, %c0_25] : memref<2x128xf32, #tpu.memory_space<vmem>>, vector<1x128xf32>
    tpu.vector_store %arg8[%c1, %c0_25], %41 {strides = array<i32>} : memref<2x128xf32, #tpu.memory_space<vmem>>, vector<1x128xf32>,
    return
  }
  func.func @transform_0(%arg0: i32) -> (i32, i32) {
    %c0_i32 = arith.constant 0 : i32
    %c0_i32_0 = arith.constant 0 : i32
    return %c0_i32, %arg0 : i32, i32
  }
  func.func @transform_1(%arg0: i32) -> (i32, i32) {
    %c0_i32 = arith.constant 0 : i32
    %c0_i32_0 = arith.constant 0 : i32
    %c0_i32_1 = arith.constant 0 : i32
    return %c0_i32, %c0_i32_0 : i32, i32
  }
  func.func @transform_2(%arg0: i32) -> (i32, i32) {
    %c0_i32 = arith.constant 0 : i32
    %c0_i32_0 = arith.constant 0 : i32
    %c0_i32_1 = arith.constant 0 : i32
    return %c0_i32, %c0_i32_0 : i32, i32
  }
  func.func @transform_3(%arg0: i32) -> (i32, i32) {
    %c0_i32 = arith.constant 0 : i32
    %c0_i32_0 = arith.constant 0 : i32
    %c0_i32_1 = arith.constant 0 : i32
    return %c0_i32, %c0_i32_0 : i32, i32
  }
  func.func @transform_4(%arg0: i32) -> (i32, i32) {
    %c0_i32 = arith.constant 0 : i32
    %c0_i32_0 = arith.constant 0 : i32
    %c0_i32_1 = arith.constant 0 : i32
    return %c0_i32, %c0_i32_0 : i32, i32
  }
  func.func @transform_5(%arg0: i32) -> (i32, i32) {
    %c0_i32 = arith.constant 0 : i32
    %c0_i32_0 = arith.constant 0 : i32
    %c0_i32_1 = arith.constant 0 : i32
    return %c0_i32, %c0_i32_0 : i32, i32
  }
  func.func @transform_6(%arg0: i32) -> (i32, i32) {
    %c0_i32 = arith.constant 0 : i32
    %c0_i32_0 = arith.constant 0 : i32
    %c0_i32_1 = arith.constant 0 : i32
    return %c0_i32, %c0_i32_0 : i32, i32
  }
  func.func @transform_7(%arg0: i32) -> (i32, i32) {
    %c0_i32 = arith.constant 0 : i32
    %c0_i32_0 = arith.constant 0 : i32
    return %c0_i32, %arg0 : i32, i32
  }
}

</mosaic_0001>

<llo_original>
// kernel: tpu_custom_call.1
$region0: #{tpu_custom_call.1}
  #allocation0 [shape = 'u32[]', space=smem, size = 0x4, offset = 0x4, fixed_abs, tag = 'smem constant byte address 0x4 - core index']
  #allocation1 [shape = 'u32[144,128]{1,0:T(1,128)}', space=vmem, size = 0x12000, scoped, tag = 'internal scratch']
  %s0 = inlined_call_operand.vmem [shape: bf16[3,128], index: 0, kind: input, shape index: {}]
  %s1 = inlined_call_operand.vmem [shape: bf16[128,3], index: 1, kind: input, shape index: {}]
  %s2 = inlined_call_operand.vmem [shape: f32[128,1], index: 2, kind: input, shape index: {}]
  %s3 = inlined_call_operand.vmem [shape: bf16[128,128], index: 3, kind: input, shape index: {}]
  %s4 = inlined_call_operand.vmem [shape: f32[128,1], index: 4, kind: input, shape index: {}]
  %s5 = inlined_call_operand.vmem [shape: bf16[2,128], index: 5, kind: input, shape index: {}]
  %s6 = inlined_call_operand.vmem [shape: f32[2,1], index: 6, kind: input, shape index: {}]
  %s7 = inlined_call_operand.hbm [shape: f32[2,128], index: 7, kind: output, shape index: {}]
  %s8 = sld [smem:[#allocation0]]
  $region38: #{tpu_custom_call.1} parent=0
    _
  %s10 = ssub.s32 1, %s8
  %s11 = scalar_select 0, %s10, %s8
  $region1: #{tpu_custom_call.1} parent=0
    #allocation2 [shape = 'u8[1024]{0}', space=vmem, size = 0x400, scoped, tag = 'output window, operand 0, single buffered']
    #allocation3 [shape = 's32[1]{0}', space=sflag, size = 0x4, scoped, tag = 'scoped memory for tpu_custom_call.1']
    %12 = vsyncpa [#allocation3], 0
    // Predicated region
    $region2: #{tpu_custom_call.1} parent=1 // pred_check
      _
    $region3: #{tpu_custom_call.1} parent=1 // pred_check_branch
      %14 = sbr.rel (0) target = $region5
    $region4: #{tpu_custom_call.1} parent=1 // pred_region
      _
    $region5: #{tpu_custom_call.1} parent=1 // pred_fallthru
      _
    // Predicated region
    $region6: #{tpu_custom_call.1} parent=1 // pred_check
      _
    $region7: #{tpu_custom_call.1} parent=1 // pred_check_branch
      %16 = sbr.rel (0) target = $region9
    $region8: #{tpu_custom_call.1} parent=1 // pred_region
      _
    $region9: #{tpu_custom_call.1} parent=1 // pred_fallthru
      _
    // Predicated region
    $region10: #{tpu_custom_call.1} parent=1 // pred_check
      _
    $region11: #{tpu_custom_call.1} parent=1 // pred_check_branch
      %18 = sbr.rel (0) target = $region13
    $region12: #{tpu_custom_call.1} parent=1 // pred_region
      _
    $region13: #{tpu_custom_call.1} parent=1 // pred_fallthru
      _
    // Predicated region
    $region14: #{tpu_custom_call.1} parent=1 // pred_check
      _
    $region15: #{tpu_custom_call.1} parent=1 // pred_check_branch
      %20 = sbr.rel (0) target = $region17
    $region16: #{tpu_custom_call.1} parent=1 // pred_region
      _
    $region17: #{tpu_custom_call.1} parent=1 // pred_fallthru
      _
    // Predicated region
    $region18: #{tpu_custom_call.1} parent=1 // pred_check
      _
    $region19: #{tpu_custom_call.1} parent=1 // pred_check_branch
      %22 = sbr.rel (0) target = $region21
    $region20: #{tpu_custom_call.1} parent=1 // pred_region
      _
    $region21: #{tpu_custom_call.1} parent=1 // pred_fallthru
      _
    // Predicated region
    $region22: #{tpu_custom_call.1} parent=1 // pred_check
      _
    $region23: #{tpu_custom_call.1} parent=1 // pred_check_branch
      %24 = sbr.rel (0) target = $region25
    $region24: #{tpu_custom_call.1} parent=1 // pred_region
      _
    $region25: #{tpu_custom_call.1} parent=1 // pred_fallthru
      _
    // Predicated region
    $region26: #{tpu_custom_call.1} parent=1 // pred_check
      _
    $region27: #{tpu_custom_call.1} parent=1 // pred_check_branch
      %26 = sbr.rel (0) target = $region29
    $region28: #{tpu_custom_call.1} parent=1 // pred_region
      _
    $region29: #{tpu_custom_call.1} parent=1 // pred_fallthru
      _
    %v28 = vld [vmem:[%s1] sm:$0xf]
    %v29 = vld [vmem:[%s1 + $0x4] sm:$0xf]
    %v30 = vld [vmem:[%s1 + $0x8] sm:$0xf]
    %v31 = vld [vmem:[%s1 + $0xc] sm:$0xf]
    %v32 = vld [vmem:[%s1 + $0x10] sm:$0xf]
    %v33 = vld [vmem:[%s1 + $0x14] sm:$0xf]
    %v34 = vld [vmem:[%s1 + $0x18] sm:$0xf]
    %v35 = vld [vmem:[%s1 + $0x1c] sm:$0xf]
    %v36 = vld [vmem:[%s1 + $0x20] sm:$0xf]
    %v37 = vld [vmem:[%s1 + $0x24] sm:$0xf]
    %v38 = vld [vmem:[%s1 + $0x28] sm:$0xf]
    %v39 = vld [vmem:[%s1 + $0x2c] sm:$0xf]
    %v40 = vld [vmem:[%s1 + $0x30] sm:$0xf]
    %v41 = vld [vmem:[%s1 + $0x34] sm:$0xf]
    %v42 = vld [vmem:[%s1 + $0x38] sm:$0xf]
    %v43 = vld [vmem:[%s1 + $0x3c] sm:$0xf]
    %v44 = vld [vmem:[%s0] sm:$0x3]
    %v45 = vld [vmem:[%s2] sm:$0xff]
    %v46 = vld [vmem:[%s2 + $0x8] sm:$0xff]
    %v47 = vld [vmem:[%s2 + $0x10] sm:$0xff]
    %v48 = vld [vmem:[%s2 + $0x18] sm:$0xff]
    %v49 = vld [vmem:[%s2 + $0x20] sm:$0xff]
    %v50 = vld [vmem:[%s2 + $0x28] sm:$0xff]
    %v51 = vld [vmem:[%s2 + $0x30] sm:$0xff]
    %v52 = vld [vmem:[%s2 + $0x38] sm:$0xff]
    %v53 = vld [vmem:[%s2 + $0x40] sm:$0xff]
    %v54 = vld [vmem:[%s2 + $0x48] sm:$0xff]
    %v55 = vld [vmem:[%s2 + $0x50] sm:$0xff]
    %v56 = vld [vmem:[%s2 + $0x58] sm:$0xff]
    %v57 = vld [vmem:[%s2 + $0x60] sm:$0xff]
    %v58 = vld [vmem:[%s2 + $0x68] sm:$0xff]
    %v59 = vld [vmem:[%s2 + $0x70] sm:$0xff]
    %v60 = vld [vmem:[%s2 + $0x78] sm:$0xff]
    %62 = vset.pattern.permute.xlu0 0
    %63 = vperm.xlu0 %62, %v45
    %v64 = vpop.permute.xlu0 %63
    %67 = vset.pattern.permute.xlu0 0
    %68 = vperm.xlu0 %67, %v46
    %v69 = vpop.permute.xlu0 %68
    %72 = vset.pattern.permute.xlu0 0
    %73 = vperm.xlu0 %72, %v47
    %v74 = vpop.permute.xlu0 %73
    %77 = vset.pattern.permute.xlu0 0
    %78 = vperm.xlu0 %77, %v48
    %v79 = vpop.permute.xlu0 %78
    %82 = vset.pattern.permute.xlu0 0
    %83 = vperm.xlu0 %82, %v49
    %v84 = vpop.permute.xlu0 %83
    %87 = vset.pattern.permute.xlu0 0
    %88 = vperm.xlu0 %87, %v50
    %v89 = vpop.permute.xlu0 %88
    %92 = vset.pattern.permute.xlu0 0
    %93 = vperm.xlu0 %92, %v51
    %v94 = vpop.permute.xlu0 %93
    %97 = vset.pattern.permute.xlu0 0
    %98 = vperm.xlu0 %97, %v52
    %v99 = vpop.permute.xlu0 %98
    %102 = vset.pattern.permute.xlu0 0
    %103 = vperm.xlu0 %102, %v53
    %v104 = vpop.permute.xlu0 %103
    %107 = vset.pattern.permute.xlu0 0
    %108 = vperm.xlu0 %107, %v54
    %v109 = vpop.permute.xlu0 %108
    %112 = vset.pattern.permute.xlu0 0
    %113 = vperm.xlu0 %112, %v55
    %v114 = vpop.permute.xlu0 %113
    %117 = vset.pattern.permute.xlu0 0
    %118 = vperm.xlu0 %117, %v56
    %v119 = vpop.permute.xlu0 %118
    %122 = vset.pattern.permute.xlu0 0
    %123 = vperm.xlu0 %122, %v57
    %v124 = vpop.permute.xlu0 %123
    %127 = vset.pattern.permute.xlu0 0
    %128 = vperm.xlu0 %127, %v58
    %v129 = vpop.permute.xlu0 %128
    %132 = vset.pattern.permute.xlu0 0
    %133 = vperm.xlu0 %132, %v59
    %v134 = vpop.permute.xlu0 %133
    %137 = vset.pattern.permute.xlu0 0
    %138 = vperm.xlu0 %137, %v60
    %v139 = vpop.permute.xlu0 %138
    %v157 = vunpack.c.l.b16 %v28
    %v158 = vunpack.c.l.b16 %v29
    %v159 = vunpack.c.l.b16 %v30
    %v160 = vunpack.c.l.b16 %v31
    %v161 = vunpack.c.l.b16 %v32
    %v162 = vunpack.c.l.b16 %v33
    %v163 = vunpack.c.l.b16 %v34
    %v164 = vunpack.c.l.b16 %v35
    %v165 = vunpack.c.l.b16 %v36
    %v166 = vunpack.c.l.b16 %v37
    %v167 = vunpack.c.l.b16 %v38
    %v168 = vunpack.c.l.b16 %v39
    %v169 = vunpack.c.l.b16 %v40
    %v170 = vunpack.c.l.b16 %v41
    %v171 = vunpack.c.l.b16 %v42
    %v172 = vunpack.c.l.b16 %v43
    %v173 = vpack.c.b16 %v158, %v157
    %v174 = vpack.c.b16 %v160, %v159
    %v175 = vpack.c.b16 %v162, %v161
    %v176 = vpack.c.b16 %v164, %v163
    %v177 = vpack.c.b16 %v166, %v165
    %v178 = vpack.c.b16 %v168, %v167
    %v179 = vpack.c.b16 %v170, %v169
    %v180 = vpack.c.b16 %v172, %v171
    %vm181 = vcmask 23552
    %v183 = vsel %vm181, %v173, 0
    %v186 = vsel %vm181, %v174, 0
    %v189 = vsel %vm181, %v175, 0
    %v192 = vsel %vm181, %v176, 0
    %v195 = vsel %vm181, %v177, 0
    %v198 = vsel %vm181, %v178, 0
    %v201 = vsel %vm181, %v179, 0
    %v204 = vsel %vm181, %v180, 0
    %vm206 = vcmask 1040384
    %vm207 = vcmask 1041408
    %v208 = vsel %vm206, 4294967295, 65535
    %v209 = vsel %vm207, %v208, 0
    %v211 = vand.u32 %v44, %v209
    %213 = vmatprep.subr.bf16.mxu0 0
    %214 = vmatpush1.bf16.msra.mxu0 %v211
    %215 = vmatprep.subr.bf16.mxu0 0
    %216 = vmatpush1.bf16.msra.mxu0 0
    %217 = vmatprep.subr.bf16.mxu0 0
    %218 = vmatpush1.bf16.msra.mxu0 0
    %219 = vmatprep.subr.bf16.mxu0 0
    %220 = vmatpush1.bf16.msra.mxu0 0
    %221 = vmatprep.subr.bf16.mxu0 0
    %222 = vmatpush1.bf16.msra.mxu0 0
    %223 = vmatprep.subr.bf16.mxu0 0
    %224 = vmatpush1.bf16.msra.mxu0 0
    %225 = vmatprep.subr.bf16.mxu0 0
    %226 = vmatpush1.bf16.msra.mxu0 0
    %227 = vmatprep.subr.bf16.mxu0 0
    %228 = vmatpush1.bf16.msra.mxu0 0
    %229 = vmatprep.subr.bf16.mxu0 0
    %230 = vmatpush1.bf16.msra.mxu0 0
    %231 = vmatprep.subr.bf16.mxu0 0
    %232 = vmatpush1.bf16.msra.mxu0 0
    %233 = vmatprep.subr.bf16.mxu0 0
    %234 = vmatpush1.bf16.msra.mxu0 0
    %235 = vmatprep.subr.bf16.mxu0 0
    %236 = vmatpush1.bf16.msra.mxu0 0
    %237 = vmatprep.subr.bf16.mxu0 0
    %238 = vmatpush1.bf16.msra.mxu0 0
    %239 = vmatprep.subr.bf16.mxu0 0
    %240 = vmatpush1.bf16.msra.mxu0 0
    %241 = vmatprep.subr.bf16.mxu0 0
    %242 = vmatpush1.bf16.msra.mxu0 0
    %243 = vmatprep.subr.bf16.mxu0 0
    %244 = vmatpush1.bf16.msra.mxu0 0
    %245 = vmatprep.mubr.bf16.mxu0 0
    %246 = vmatmul.mubr.bf16.gmra.mrb[0].mxu0 %v183
    %v247 = vpop.f32.mrb[0].mxu0
    %v248 = vadd.f32 %v64, %v247
    %v249 = vpop.f32.mrb[0].mxu0
    %v250 = vpop.f32.mrb[0].mxu0
    %v251 = vadd.f32 %v69, %v250
    %v252 = vpop.f32.mrb[0].mxu0
    %253 = vmatprep.mubr.bf16.mxu0 0
    %254 = vmatmul.mubr.bf16.gmra.mrb[0].mxu0 %v186
    %v255 = vpop.f32.mrb[0].mxu0
    %v256 = vadd.f32 %v74, %v255
    %v257 = vpop.f32.mrb[0].mxu0
    %v258 = vpop.f32.mrb[0].mxu0
    %v259 = vadd.f32 %v79, %v258
    %v260 = vpop.f32.mrb[0].mxu0
    %261 = vmatprep.mubr.bf16.mxu0 0
    %262 = vmatmul.mubr.bf16.gmra.mrb[0].mxu0 %v189
    %v263 = vpop.f32.mrb[0].mxu0
    %v264 = vadd.f32 %v84, %v263
    %v265 = vpop.f32.mrb[0].mxu0
    %v266 = vpop.f32.mrb[0].mxu0
    %v267 = vadd.f32 %v89, %v266
    %v268 = vpop.f32.mrb[0].mxu0
    %269 = vmatprep.mubr.bf16.mxu0 0
    %270 = vmatmul.mubr.bf16.gmra.mrb[0].mxu0 %v192
    %v271 = vpop.f32.mrb[0].mxu0
    %v272 = vadd.f32 %v94, %v271
    %v273 = vpop.f32.mrb[0].mxu0
    %v274 = vpop.f32.mrb[0].mxu0
    %v275 = vadd.f32 %v99, %v274
    %v276 = vpop.f32.mrb[0].mxu0
    %277 = vmatprep.mubr.bf16.mxu0 0
    %278 = vmatmul.mubr.bf16.gmra.mrb[0].mxu0 %v195
    %v279 = vpop.f32.mrb[0].mxu0
    %v280 = vadd.f32 %v104, %v279
    %v281 = vpop.f32.mrb[0].mxu0
    %v282 = vpop.f32.mrb[0].mxu0
    %v283 = vadd.f32 %v109, %v282
    %v284 = vpop.f32.mrb[0].mxu0
    %285 = vmatprep.mubr.bf16.mxu0 0
    %286 = vmatmul.mubr.bf16.gmra.mrb[0].mxu0 %v198
    %v287 = vpop.f32.mrb[0].mxu0
    %v288 = vadd.f32 %v114, %v287
    %v289 = vpop.f32.mrb[0].mxu0
    %v290 = vpop.f32.mrb[0].mxu0
    %v291 = vadd.f32 %v119, %v290
    %v292 = vpop.f32.mrb[0].mxu0
    %293 = vmatprep.mubr.bf16.mxu0 0
    %294 = vmatmul.mubr.bf16.gmra.mrb[0].mxu0 %v201
    %v295 = vpop.f32.mrb[0].mxu0
    %v296 = vadd.f32 %v124, %v295
    %v297 = vpop.f32.mrb[0].mxu0
    %v298 = vpop.f32.mrb[0].mxu0
    %v299 = vadd.f32 %v129, %v298
    %v300 = vpop.f32.mrb[0].mxu0
    %301 = vmatprep.mubr.bf16.mxu0 0
    %302 = vmatmul.mubr.bf16.gmra.mrb[0].mxu0 %v204
    %v303 = vpop.f32.mrb[0].mxu0
    %v304 = vadd.f32 %v134, %v303
    %v305 = vpop.f32.mrb[0].mxu0
    %v306 = vpop.f32.mrb[0].mxu0
    %v307 = vadd.f32 %v139, %v306
    %v308 = vpop.f32.mrb[0].mxu0
    %309 = vdwg.mxu0
    %v310 = vmul.f32 %v248, 0.5
    %v311 = vmul.f32 %v251, 0.5
    %v312 = vmul.f32 %v256, 0.5
    %v313 = vmul.f32 %v259, 0.5
    %v314 = vmul.f32 %v264, 0.5
    %v315 = vmul.f32 %v267, 0.5
    %v316 = vmul.f32 %v272, 0.5
    %v317 = vmul.f32 %v275, 0.5
    %v318 = vmul.f32 %v280, 0.5
    %v319 = vmul.f32 %v283, 0.5
    %v320 = vmul.f32 %v288, 0.5
    %v321 = vmul.f32 %v291, 0.5
    %v322 = vmul.f32 %v296, 0.5
    %v323 = vmul.f32 %v299, 0.5
    %v324 = vmul.f32 %v304, 0.5
    %v325 = vmul.f32 %v307, 0.5
    %v326 = vtanh.pop %v310
    %v327 = vtanh.pop %v311
    %v328 = vtanh.pop %v312
    %v329 = vtanh.pop %v313
    %v330 = vtanh.pop %v314
    %v331 = vtanh.pop %v315
    %v332 = vtanh.pop %v316
    %v333 = vtanh.pop %v317
    %v334 = vtanh.pop %v318
    %v335 = vtanh.pop %v319
    %v336 = vtanh.pop %v320
    %v337 = vtanh.pop %v321
    %v338 = vtanh.pop %v322
    %v339 = vtanh.pop %v323
    %v340 = vtanh.pop %v324
    %v341 = vtanh.pop %v325
    %v342 = vadd.f32 %v326, 1.0
    %v343 = vadd.f32 %v327, 1.0
    %v344 = vadd.f32 %v328, 1.0
    %v345 = vadd.f32 %v329, 1.0
    %v346 = vadd.f32 %v330, 1.0
    %v347 = vadd.f32 %v331, 1.0
    %v348 = vadd.f32 %v332, 1.0
    %v349 = vadd.f32 %v333, 1.0
    %v350 = vadd.f32 %v334, 1.0
    %v351 = vadd.f32 %v335, 1.0
    %v352 = vadd.f32 %v336, 1.0
    %v353 = vadd.f32 %v337, 1.0
    %v354 = vadd.f32 %v338, 1.0
    %v355 = vadd.f32 %v339, 1.0
    %v356 = vadd.f32 %v340, 1.0
    %v357 = vadd.f32 %v341, 1.0
    %v358 = vmul.f32 %v310, %v342
    %v359 = vmul.f32 %v311, %v343
    %v360 = vmul.f32 %v312, %v344
    %v361 = vmul.f32 %v313, %v345
    %v362 = vmul.f32 %v314, %v346
    %v363 = vmul.f32 %v315, %v347
    %v364 = vmul.f32 %v316, %v348
    %v365 = vmul.f32 %v317, %v349
    %v366 = vmul.f32 %v318, %v350
    %v367 = vmul.f32 %v319, %v351
    %v368 = vmul.f32 %v320, %v352
    %v369 = vmul.f32 %v321, %v353
    %v370 = vmul.f32 %v322, %v354
    %v371 = vmul.f32 %v323, %v355
    %v372 = vmul.f32 %v324, %v356
    %v373 = vmul.f32 %v325, %v357
    %v374 = vld [vmem:[%s3] sm:$0xf]
    %v375 = vld [vmem:[%s3 + $0x4] sm:$0xf]
    %v376 = vld [vmem:[%s3 + $0x8] sm:$0xf]
    %v377 = vld [vmem:[%s3 + $0xc] sm:$0xf]
    %v378 = vld [vmem:[%s3 + $0x10] sm:$0xf]
    %v379 = vld [vmem:[%s3 + $0x14] sm:$0xf]
    %v380 = vld [vmem:[%s3 + $0x18] sm:$0xf]
    %v381 = vld [vmem:[%s3 + $0x1c] sm:$0xf]
    %v382 = vld [vmem:[%s3 + $0x20] sm:$0xf]
    %v383 = vld [vmem:[%s3 + $0x24] sm:$0xf]
    %v384 = vld [vmem:[%s3 + $0x28] sm:$0xf]
    %v385 = vld [vmem:[%s3 + $0x2c] sm:$0xf]
    %v386 = vld [vmem:[%s3 + $0x30] sm:$0xf]
    %v387 = vld [vmem:[%s3 + $0x34] sm:$0xf]
    %v388 = vld [vmem:[%s3 + $0x38] sm:$0xf]
    %v389 = vld [vmem:[%s3 + $0x3c] sm:$0xf]
    %v390 = vpack.c.bf16 %v359, %v358
    %v391 = vpack.c.bf16 %v361, %v360
    %v392 = vpack.c.bf16 %v363, %v362
    %v393 = vpack.c.bf16 %v365, %v364
    %v394 = vpack.c.bf16 %v367, %v366
    %v395 = vpack.c.bf16 %v369, %v368
    %v396 = vpack.c.bf16 %v371, %v370
    %v397 = vpack.c.bf16 %v373, %v372
    %v398 = vld [vmem:[%s4] sm:$0xff]
    %v399 = vld [vmem:[%s4 + $0x8] sm:$0xff]
    %v400 = vld [vmem:[%s4 + $0x10] sm:$0xff]
    %v401 = vld [vmem:[%s4 + $0x18] sm:$0xff]
    %v402 = vld [vmem:[%s4 + $0x20] sm:$0xff]
    %v403 = vld [vmem:[%s4 + $0x28] sm:$0xff]
    %v404 = vld [vmem:[%s4 + $0x30] sm:$0xff]
    %v405 = vld [vmem:[%s4 + $0x38] sm:$0xff]
    %v406 = vld [vmem:[%s4 + $0x40] sm:$0xff]
    %v407 = vld [vmem:[%s4 + $0x48] sm:$0xff]
    %v408 = vld [vmem:[%s4 + $0x50] sm:$0xff]
    %v409 = vld [vmem:[%s4 + $0x58] sm:$0xff]
    %v410 = vld [vmem:[%s4 + $0x60] sm:$0xff]
    %v411 = vld [vmem:[%s4 + $0x68] sm:$0xff]
    %v412 = vld [vmem:[%s4 + $0x70] sm:$0xff]
    %v413 = vld [vmem:[%s4 + $0x78] sm:$0xff]
    %415 = vset.pattern.permute.xlu0 0
    %416 = vperm.xlu0 %415, %v398
    %v417 = vpop.permute.xlu0 %416
    %420 = vset.pattern.permute.xlu0 0
    %421 = vperm.xlu0 %420, %v399
    %v422 = vpop.permute.xlu0 %421
    %425 = vset.pattern.permute.xlu0 0
    %426 = vperm.xlu0 %425, %v400
    %v427 = vpop.permute.xlu0 %426
    %430 = vset.pattern.permute.xlu0 0
    %431 = vperm.xlu0 %430, %v401
    %v432 = vpop.permute.xlu0 %431
    %435 = vset.pattern.permute.xlu0 0
    %436 = vperm.xlu0 %435, %v402
    %v437 = vpop.permute.xlu0 %436
    %440 = vset.pattern.permute.xlu0 0
    %441 = vperm.xlu0 %440, %v403
    %v442 = vpop.permute.xlu0 %441
    %445 = vset.pattern.permute.xlu0 0
    %446 = vperm.xlu0 %445, %v404
    %v447 = vpop.permute.xlu0 %446
    %450 = vset.pattern.permute.xlu0 0
    %451 = vperm.xlu0 %450, %v405
    %v452 = vpop.permute.xlu0 %451
    %455 = vset.pattern.permute.xlu0 0
    %456 = vperm.xlu0 %455, %v406
    %v457 = vpop.permute.xlu0 %456
    %460 = vset.pattern.permute.xlu0 0
    %461 = vperm.xlu0 %460, %v407
    %v462 = vpop.permute.xlu0 %461
    %465 = vset.pattern.permute.xlu0 0
    %466 = vperm.xlu0 %465, %v408
    %v467 = vpop.permute.xlu0 %466
    %470 = vset.pattern.permute.xlu0 0
    %471 = vperm.xlu0 %470, %v409
    %v472 = vpop.permute.xlu0 %471
    %475 = vset.pattern.permute.xlu0 0
    %476 = vperm.xlu0 %475, %v410
    %v477 = vpop.permute.xlu0 %476
    %480 = vset.pattern.permute.xlu0 0
    %481 = vperm.xlu0 %480, %v411
    %v482 = vpop.permute.xlu0 %481
    %485 = vset.pattern.permute.xlu0 0
    %486 = vperm.xlu0 %485, %v412
    %v487 = vpop.permute.xlu0 %486
    %490 = vset.pattern.permute.xlu0 0
    %491 = vperm.xlu0 %490, %v413
    %v492 = vpop.permute.xlu0 %491
    %v510 = vunpack.c.l.b16 %v374
    %v511 = vunpack.c.l.b16 %v375
    %v512 = vunpack.c.l.b16 %v376
    %v513 = vunpack.c.l.b16 %v377
    %v514 = vunpack.c.l.b16 %v378
    %v515 = vunpack.c.l.b16 %v379
    %v516 = vunpack.c.l.b16 %v380
    %v517 = vunpack.c.l.b16 %v381
    %v518 = vunpack.c.l.b16 %v382
    %v519 = vunpack.c.l.b16 %v383
    %v520 = vunpack.c.l.b16 %v384
    %v521 = vunpack.c.l.b16 %v385
    %v522 = vunpack.c.l.b16 %v386
    %v523 = vunpack.c.l.b16 %v387
    %v524 = vunpack.c.l.b16 %v388
    %v525 = vunpack.c.l.b16 %v389
    %v526 = vpack.c.b16 %v511, %v510
    %v527 = vpack.c.b16 %v513, %v512
    %v528 = vpack.c.b16 %v515, %v514
    %v529 = vpack.c.b16 %v517, %v516
    %v530 = vpack.c.b16 %v519, %v518
    %v531 = vpack.c.b16 %v521, %v520
    %v532 = vpack.c.b16 %v523, %v522
    %v533 = vpack.c.b16 %v525, %v524
    %542 = vmatprep.subr.bf16.mxu0 0
    %543 = vmatpush1.bf16.msra.mxu0 %v390
    %544 = vmatprep.subr.bf16.mxu0 0
    %545 = vmatpush1.bf16.msra.mxu0 %v391
    %546 = vmatprep.subr.bf16.mxu0 0
    %547 = vmatpush1.bf16.msra.mxu0 %v392
    %548 = vmatprep.subr.bf16.mxu0 0
    %549 = vmatpush1.bf16.msra.mxu0 %v393
    %550 = vmatprep.subr.bf16.mxu0 0
    %551 = vmatpush1.bf16.msra.mxu0 %v394
    %552 = vmatprep.subr.bf16.mxu0 0
    %553 = vmatpush1.bf16.msra.mxu0 %v395
    %554 = vmatprep.subr.bf16.mxu0 0
    %555 = vmatpush1.bf16.msra.mxu0 %v396
    %556 = vmatprep.subr.bf16.mxu0 0
    %557 = vmatpush1.bf16.msra.mxu0 %v397
    %558 = vmatprep.subr.bf16.mxu0 0
    %559 = vmatpush1.bf16.msra.mxu0 0
    %560 = vmatprep.subr.bf16.mxu0 0
    %561 = vmatpush1.bf16.msra.mxu0 0
    %562 = vmatprep.subr.bf16.mxu0 0
    %563 = vmatpush1.bf16.msra.mxu0 0
    %564 = vmatprep.subr.bf16.mxu0 0
    %565 = vmatpush1.bf16.msra.mxu0 0
    %566 = vmatprep.subr.bf16.mxu0 0
    %567 = vmatpush1.bf16.msra.mxu0 0
    %568 = vmatprep.subr.bf16.mxu0 0
    %569 = vmatpush1.bf16.msra.mxu0 0
    %570 = vmatprep.subr.bf16.mxu0 0
    %571 = vmatpush1.bf16.msra.mxu0 0
    %572 = vmatprep.subr.bf16.mxu0 0
    %573 = vmatpush1.bf16.msra.mxu0 0
    %574 = vmatprep.mubr.bf16.mxu0 0
    %575 = vmatmul.mubr.bf16.gmra.mrb[0].mxu0 %v526
    %v576 = vpop.f32.mrb[0].mxu0
    %v577 = vadd.f32 %v417, %v576
    %v578 = vpop.f32.mrb[0].mxu0
    %v579 = vpop.f32.mrb[0].mxu0
    %v580 = vadd.f32 %v422, %v579
    %v581 = vpop.f32.mrb[0].mxu0
    %582 = vmatprep.mubr.bf16.mxu0 0
    %583 = vmatmul.mubr.bf16.gmra.mrb[0].mxu0 %v527
    %v584 = vpop.f32.mrb[0].mxu0
    %v585 = vadd.f32 %v427, %v584
    %v586 = vpop.f32.mrb[0].mxu0
    %v587 = vpop.f32.mrb[0].mxu0
    %v588 = vadd.f32 %v432, %v587
    %v589 = vpop.f32.mrb[0].mxu0
    %590 = vmatprep.mubr.bf16.mxu0 0
    %591 = vmatmul.mubr.bf16.gmra.mrb[0].mxu0 %v528
    %v592 = vpop.f32.mrb[0].mxu0
    %v593 = vadd.f32 %v437, %v592
    %v594 = vpop.f32.mrb[0].mxu0
    %v595 = vpop.f32.mrb[0].mxu0
    %v596 = vadd.f32 %v442, %v595
    %v597 = vpop.f32.mrb[0].mxu0
    %598 = vmatprep.mubr.bf16.mxu0 0
    %599 = vmatmul.mubr.bf16.gmra.mrb[0].mxu0 %v529
    %v600 = vpop.f32.mrb[0].mxu0
    %v601 = vadd.f32 %v447, %v600
    %v602 = vpop.f32.mrb[0].mxu0
    %v603 = vpop.f32.mrb[0].mxu0
    %v604 = vadd.f32 %v452, %v603
    %v605 = vpop.f32.mrb[0].mxu0
    %606 = vmatprep.mubr.bf16.mxu0 0
    %607 = vmatmul.mubr.bf16.gmra.mrb[0].mxu0 %v530
    %v608 = vpop.f32.mrb[0].mxu0
    %v609 = vadd.f32 %v457, %v608
    %v610 = vpop.f32.mrb[0].mxu0
    %v611 = vpop.f32.mrb[0].mxu0
    %v612 = vadd.f32 %v462, %v611
    %v613 = vpop.f32.mrb[0].mxu0
    %614 = vmatprep.mubr.bf16.mxu0 0
    %615 = vmatmul.mubr.bf16.gmra.mrb[0].mxu0 %v531
    %v616 = vpop.f32.mrb[0].mxu0
    %v617 = vadd.f32 %v467, %v616
    %v618 = vpop.f32.mrb[0].mxu0
    %v619 = vpop.f32.mrb[0].mxu0
    %v620 = vadd.f32 %v472, %v619
    %v621 = vpop.f32.mrb[0].mxu0
    %622 = vmatprep.mubr.bf16.mxu0 0
    %623 = vmatmul.mubr.bf16.gmra.mrb[0].mxu0 %v532
    %v624 = vpop.f32.mrb[0].mxu0
    %v625 = vadd.f32 %v477, %v624
    %v626 = vpop.f32.mrb[0].mxu0
    %v627 = vpop.f32.mrb[0].mxu0
    %v628 = vadd.f32 %v482, %v627
    %v629 = vpop.f32.mrb[0].mxu0
    %630 = vmatprep.mubr.bf16.mxu0 0
    %631 = vmatmul.mubr.bf16.gmra.mrb[0].mxu0 %v533
    %v632 = vpop.f32.mrb[0].mxu0
    %v633 = vadd.f32 %v487, %v632
    %v634 = vpop.f32.mrb[0].mxu0
    %v635 = vpop.f32.mrb[0].mxu0
    %v636 = vadd.f32 %v492, %v635
    %v637 = vpop.f32.mrb[0].mxu0
    %638 = vdwg.mxu0
    %v639 = vmul.f32 %v577, 0.5
    %v640 = vmul.f32 %v580, 0.5
    %v641 = vmul.f32 %v585, 0.5
    %v642 = vmul.f32 %v588, 0.5
    %v643 = vmul.f32 %v593, 0.5
    %v644 = vmul.f32 %v596, 0.5
    %v645 = vmul.f32 %v601, 0.5
    %v646 = vmul.f32 %v604, 0.5
    %v647 = vmul.f32 %v609, 0.5
    %v648 = vmul.f32 %v612, 0.5
    %v649 = vmul.f32 %v617, 0.5
    %v650 = vmul.f32 %v620, 0.5
    %v651 = vmul.f32 %v625, 0.5
    %v652 = vmul.f32 %v628, 0.5
    %v653 = vmul.f32 %v633, 0.5
    %v654 = vmul.f32 %v636, 0.5
    %v655 = vtanh.pop %v639
    %v656 = vtanh.pop %v640
    %v657 = vtanh.pop %v641
    %v658 = vtanh.pop %v642
    %v659 = vtanh.pop %v643
    %v660 = vtanh.pop %v644
    %v661 = vtanh.pop %v645
    %v662 = vtanh.pop %v646
    %v663 = vtanh.pop %v647
    %v664 = vtanh.pop %v648
    %v665 = vtanh.pop %v649
    %v666 = vtanh.pop %v650
    %v667 = vtanh.pop %v651
    %v668 = vtanh.pop %v652
    %v669 = vtanh.pop %v653
    %v670 = vtanh.pop %v654
    %v671 = vadd.f32 %v655, 1.0
    %v672 = vadd.f32 %v656, 1.0
    %v673 = vadd.f32 %v657, 1.0
    %v674 = vadd.f32 %v658, 1.0
    %v675 = vadd.f32 %v659, 1.0
    %v676 = vadd.f32 %v660, 1.0
    %v677 = vadd.f32 %v661, 1.0
    %v678 = vadd.f32 %v662, 1.0
    %v679 = vadd.f32 %v663, 1.0
    %v680 = vadd.f32 %v664, 1.0
    %v681 = vadd.f32 %v665, 1.0
    %v682 = vadd.f32 %v666, 1.0
    %v683 = vadd.f32 %v667, 1.0
    %v684 = vadd.f32 %v668, 1.0
    %v685 = vadd.f32 %v669, 1.0
    %v686 = vadd.f32 %v670, 1.0
    %v687 = vmul.f32 %v639, %v671
    %v688 = vmul.f32 %v640, %v672
    %v689 = vmul.f32 %v641, %v673
    %v690 = vmul.f32 %v642, %v674
    %v691 = vmul.f32 %v643, %v675
    %v692 = vmul.f32 %v644, %v676
    %v693 = vmul.f32 %v645, %v677
    %v694 = vmul.f32 %v646, %v678
    %v695 = vmul.f32 %v647, %v679
    %v696 = vmul.f32 %v648, %v680
    %v697 = vmul.f32 %v649, %v681
    %v698 = vmul.f32 %v650, %v682
    %v699 = vmul.f32 %v651, %v683
    %v700 = vmul.f32 %v652, %v684
    %v701 = vmul.f32 %v653, %v685
    %v702 = vmul.f32 %v654, %v686
    %v703 = vld [vmem:[%s5] sm:$0x1]
    %v704 = vpack.c.bf16 %v688, %v687
    %v705 = vpack.c.bf16 %v690, %v689
    %v706 = vpack.c.bf16 %v692, %v691
    %v707 = vpack.c.bf16 %v694, %v693
    %v708 = vpack.c.bf16 %v696, %v695
    %v709 = vpack.c.bf16 %v698, %v697
    %v710 = vpack.c.bf16 %v700, %v699
    %v711 = vpack.c.bf16 %v702, %v701
    %v712 = vld [vmem:[%s6] sm:$0x3]
    %714 = vset.pattern.permute.xlu0 0
    %715 = vperm.xlu0 %714, %v712
    %v716 = vpop.permute.xlu0 %715
    %718 = vmatprep.subr.bf16.mxu0 0
    %719 = vmatpush1.bf16.msra.mxu0 %v704
    %720 = vmatprep.subr.bf16.mxu0 0
    %721 = vmatpush1.bf16.msra.mxu0 %v705
    %722 = vmatprep.subr.bf16.mxu0 0
    %723 = vmatpush1.bf16.msra.mxu0 %v706
    %724 = vmatprep.subr.bf16.mxu0 0
    %725 = vmatpush1.bf16.msra.mxu0 %v707
    %726 = vmatprep.subr.bf16.mxu0 0
    %727 = vmatpush1.bf16.msra.mxu0 %v708
    %728 = vmatprep.subr.bf16.mxu0 0
    %729 = vmatpush1.bf16.msra.mxu0 %v709
    %730 = vmatprep.subr.bf16.mxu0 0
    %731 = vmatpush1.bf16.msra.mxu0 %v710
    %732 = vmatprep.subr.bf16.mxu0 0
    %733 = vmatpush1.bf16.msra.mxu0 %v711
    %734 = vmatprep.subr.bf16.mxu0 0
    %735 = vmatpush1.bf16.msra.mxu0 0
    %736 = vmatprep.subr.bf16.mxu0 0
    %737 = vmatpush1.bf16.msra.mxu0 0
    %738 = vmatprep.subr.bf16.mxu0 0
    %739 = vmatpush1.bf16.msra.mxu0 0
    %740 = vmatprep.subr.bf16.mxu0 0
    %741 = vmatpush1.bf16.msra.mxu0 0
    %742 = vmatprep.subr.bf16.mxu0 0
    %743 = vmatpush1.bf16.msra.mxu0 0
    %744 = vmatprep.subr.bf16.mxu0 0
    %745 = vmatpush1.bf16.msra.mxu0 0
    %746 = vmatprep.subr.bf16.mxu0 0
    %747 = vmatpush1.bf16.msra.mxu0 0
    %748 = vmatprep.subr.bf16.mxu0 0
    %749 = vmatpush1.bf16.msra.mxu0 0
    %750 = vmatprep.mubr.bf16.mxu0 0
    %751 = vmatmul.mubr.bf16.gmra.mrb[0].mxu0 %v703
    %v752 = vpop.f32.mrb[0].mxu0
    %v753 = vadd.f32 %v716, %v752
    %v754 = vpop.f32.mrb[0].mxu0
    %v755 = vpop.f32.mrb[0].mxu0
    %v756 = vpop.f32.mrb[0].mxu0
    %757 = vdwg.mxu0
    %758 = vst [vmem:[#allocation2] sm:$0x1] %v753
    %v759 = vmax.f32 %v753, -20.0
    %v760 = vmin.f32 %v759, 2.0
    %v761 = vmul.f32 %v760, 1.442695
    %v762 = vpow.pop %v761
    %763 = vst [vmem:[#allocation2] sm:$0x2] %v762
    // Predicated region
    $region30: #{tpu_custom_call.1} parent=1 // pred_check
      _
    $region31: #{tpu_custom_call.1} parent=1 // pred_check_branch
      %765 = sbr.rel (0) target = $region33
    $region32: #{tpu_custom_call.1} parent=1 // pred_region
      %s767 = ssub.s32 32, 32
      %768 = vsyncadd [#allocation3], %s767
      %s770 = sshll.u32 [#allocation2], 4
      %s771 = int_to_ptr.vmem [resolvable:$true] %s770
      %773 = dma.vmem_to_hbm [thread:$0]  %s771, 32, %s7, [#allocation3]
    $region33: #{tpu_custom_call.1} parent=1 // pred_fallthru
      _
    // Predicated region
    $region34: #{tpu_custom_call.1} parent=1 // pred_check
      _
    $region35: #{tpu_custom_call.1} parent=1 // pred_check_branch
      %775 = sbr.rel (0) target = $region37
    $region36: #{tpu_custom_call.1} parent=1 // pred_region
      %776 = dma.done [#allocation3], 32
    $region37: #{tpu_custom_call.1} parent=1 // pred_fallthru
      _
    %777 = vsyncpa [#allocation3], 1

</llo_original>
